<compile_context>
chip_gen: v6e
topology: v6e:2x2x1
jax: 0.10.0
libtpu: 0.0.40
codegen_flags: <defaults>
</compile_context>

<pallas_src>
import functools

import jax
import jax.numpy as jnp
from jax.experimental import pallas as pl
from jax.experimental.pallas import tpu as pltpu


# -----------------------------------------------------------------------------
# Fused kernel: all layers + prediction for a batch of gb graphs
#   layer 0 :              fea = tanh(h @ Wl + bl) ; hid = prod_over_nodes fea
#   layer l>0: h = adj @ h; fea = tanh(h @ Wl + bl) ; hid = prod_over_nodes fea
#   score    = sum_l hid_l @ Wp_l  + sum_l b_pred_l
# -----------------------------------------------------------------------------
def fused_forward_kernel(adj_ref, x_ref, w_ref, b_ref, wp_ref, bp_ref, out_ref, *,
                         num_layers, n_valid):
    gb, n8, din = x_ref.shape
    r = w_ref.shape[-1]
    o = out_ref.shape[-1]

    adj = adj_ref[...].astype(jnp.float32)   # bf16 in HBM ('sum') -> exact f32 in VMEM
    h = x_ref[...]                            # (gb, n8, din) f32

    need_mask = n_valid < n8
    if need_mask:
        # broadcastable (1, n8, 1) mask -- a few vregs, not gb*n8*r (perf item 6)
        node_id = jax.lax.broadcasted_iota(jnp.int32, (1, n8, 1), 1)
        pad_rows = node_id >= n_valid

    # node count for the halving tree; extra rows are padded with 1.0 in VMEM only
    n_pow2 = 1
    while n_pow2 < n8:
        n_pow2 *= 2

    score = jnp.zeros((gb, o), jnp.float32)
    for layer in range(num_layers):
        if layer > 0:
            # neighbor aggregation, batched over the graph axis
            h = jnp.einsum("gnm,gmd->gnd", adj, h,
                           preferred_element_type=jnp.float32)
        w = w_ref[layer]                      # (din, r)
        b = b_ref[layer]                      # (1, r)   -- folded ones-column
        fea = jnp.tanh(
            jnp.dot(h.reshape(gb * n8, din), w,
                    preferred_element_type=jnp.float32) + b
        ).reshape(gb, n8, r)
        if need_mask:
            fea = jnp.where(pad_rows, jnp.float32(1.0), fea)   # padded nodes -> identity
        if n_pow2 != n8:
            fea = jnp.concatenate(
                [fea, jnp.ones((gb, n_pow2 - n8, r), jnp.float32)], axis=1)
        # product over the node axis via a static pairwise halving tree
        while fea.shape[1] > 1:
            half = fea.shape[1] // 2
            fea = fea[:, :half, :] * fea[:, half:, :]
        hid = fea[:, 0, :]                    # (gb, r)
        # fused prediction head for this layer (perf item 1)
        score = score + jnp.dot(hid, wp_ref[layer],
                                preferred_element_type=jnp.float32)

    out_ref[...] = (score + bp_ref[...]).reshape(gb, 1, o).astype(out_ref.dtype)


def fused_forward_call(adj, x, w_main, w_bias, wp, bp_sum, *,
                       gb, n_valid, vmem_limit_bytes):
    g_pad, n8, din = x.shape
    num_layers, _, r = w_main.shape
    o = wp.shape[-1]

    adj_spec_kwargs = {}
    if gb * n8 * n8 * adj.dtype.itemsize > (8 << 20):
        # very large adjacency block: single-buffer it instead of OOMing v7x VMEM
        adj_spec_kwargs["pipeline_mode"] = pl.Buffered(1)

    out = pl.pallas_call(
        functools.partial(fused_forward_kernel,
                          num_layers=num_layers, n_valid=n_valid),
        out_shape=jax.ShapeDtypeStruct((g_pad, 1, o), jnp.float32),
        grid_spec=pltpu.PrefetchScalarGridSpec(
            num_scalar_prefetch=0,
            grid=(g_pad // gb,),
            in_specs=[
                pl.BlockSpec((gb, n8, n8), lambda g: (g, 0, 0), **adj_spec_kwargs),
                pl.BlockSpec((gb, n8, din), lambda g: (g, 0, 0)),
                pl.BlockSpec((num_layers, din, r), lambda g: (0, 0, 0)),
                pl.BlockSpec((num_layers, 1, r), lambda g: (0, 0, 0)),
                pl.BlockSpec((num_layers, r, o), lambda g: (0, 0, 0)),
                pl.BlockSpec((1, o), lambda g: (0, 0)),
            ],
            out_specs=pl.BlockSpec((gb, 1, o), lambda g: (g, 0, 0)),
        ),
        compiler_params=pltpu.CompilerParams(
            dimension_semantics=("parallel",),
            vmem_limit_bytes=vmem_limit_bytes),
    )(adj, x, w_main, w_bias, wp, bp_sum)
    return out.reshape(g_pad, o)


# -----------------------------------------------------------------------------
# Forward wrapper (glue in plain JAX, hot path in the single kernel above)
# -----------------------------------------------------------------------------
def graph_cnn_forward(params, X, adj, *, neighbor_pooling_type="sum"):
    W_cp, W_pred, b_pred = params["W_cp"], params["W_pred"], params["b_pred"]
    L, _, R = W_cp.shape
    G, N, Din = X.shape
    O = W_pred.shape[1]

    if neighbor_pooling_type == "max":
        # TODO(synk): 'max' neighbor pooling calls self.maxpool which is undefined
        # in the reference module; not implemented.
        raise NotImplementedError("max neighbor pooling is undefined in the reference")

    adj = adj.astype(jnp.float32)
    if neighbor_pooling_type == "average":
        # layer-invariant: degree-normalize ONCE (guarded so isolated nodes don't Inf/NaN)
        degree = jnp.sum(adj, axis=-1, keepdims=True)
        adj = adj / jnp.maximum(degree, 1.0)
        adj_dtype = jnp.float32          # normalized degrees not exact in bf16
    else:
        adj_dtype = jnp.bfloat16         # 0/1 (+ self-loop) adjacency is exact in bf16

    # Fold the ones-column into a bias: split the CP weight into main + bias row.
    w_main = W_cp[:, :Din, :]                        # (L, Din, R)
    w_bias = W_cp[:, Din:Din + 1, :]                 # (L, 1,   R)
    wp = jnp.swapaxes(W_pred, 1, 2).astype(jnp.float32)   # (L, R, O)
    bp_sum = jnp.sum(b_pred, axis=0, keepdims=True)        # (1, O)

    # Pad the node axis only to a multiple of 8 (sublane); the halving tree pads
    # to the next pow2 with 1.0 inside the kernel (VMEM-only) -- perf item 2.
    n8 = max(8, -(-N // 8) * 8)
    if n8 != N:
        X = jnp.pad(X, ((0, 0), (0, n8 - N), (0, 0)))
        adj = jnp.pad(adj, ((0, 0), (0, n8 - N), (0, n8 - N)))
    adj = adj.astype(adj_dtype)

    # Graphs per grid step: target ~256 GEMM rows, keep the adj block <= ~8 MiB,
    # and leave >=2 grid steps so both v7x TensorCores get work (perf items 3/4).
    gb = max(1, -(-256 // n8))
    gb = min(gb, G)
    gb = min(gb, max(1, -(-G // 2)))
    gb = min(gb, max(1, (8 << 20) // (n8 * n8 * adj.dtype.itemsize)))
    g_pad = -(-G // gb) * gb
    if g_pad != G:
        X = jnp.pad(X, ((0, g_pad - G), (0, 0), (0, 0)))
        adj = jnp.pad(adj, ((0, g_pad - G), (0, 0), (0, 0)))

    # Explicit VMEM budget: double-buffered blocks + intermediate working set.
    blocks = (gb * n8 * n8 * adj.dtype.itemsize
              + gb * n8 * Din * 4
              + L * Din * R * 4 + L * R * 4 + L * R * O * 4 + O * 4
              + gb * O * 4)
    work = gb * n8 * max(Din, R) * 4 * 6
    vmem_limit = int(min(max(2 * blocks + work + (4 << 20), 32 << 20), 96 << 20))

    # TODO(synk): F.dropout on per-layer scores is implemented as identity (eval mode).
    score = fused_forward_call(adj, X, w_main, w_bias, wp, bp_sum,
                               gb=gb, n_valid=N, vmem_limit_bytes=vmem_limit)
    return score[:G]


# -----------------------------------------------------------------------------
# Pure-JAX reference for verification
# -----------------------------------------------------------------------------
def reference_forward(params, X, adj, *, neighbor_pooling_type="sum"):
    W_cp, W_pred, b_pred = params["W_cp"], params["W_pred"], params["b_pred"]
    L = W_cp.shape[0]
    G, N, _ = X.shape
    average = neighbor_pooling_type == "average"

    def cp(h, w):
        ones = jnp.ones((G, N, 1), h.dtype)
        x_aug = jnp.concatenate([h, ones], axis=-1)
        fea = jnp.tanh(jnp.einsum("gnd,dr->gnr", x_aug, w))
        return jnp.prod(fea, axis=1)

    hidden = [cp(X, W_cp[0])]
    h = X
    for layer in range(L - 1):
        pooled = jnp.einsum("gnm,gmd->gnd", adj, h)
        if average:
            pooled = pooled / jnp.sum(adj, axis=-1, keepdims=True)
        h = pooled
        hidden.append(cp(h, W_cp[layer + 1]))

    score = jnp.zeros((G, W_pred.shape[1]), jnp.float32)
    for l in range(L):
        score = score + hidden[l] @ W_pred[l].T + b_pred[l]
    return score


# -----------------------------------------------------------------------------
if __name__ == "__main__":
    key = jax.random.PRNGKey(0)
    G, N, input_dim = 2, 16, 7
    hidden_dim, rank_dim, output_dim = 32, 128, 8       # hidden_dim unused by forward
    num_layers = 3
    learn_eps = False
    neighbor_pooling_type = "sum"

    keys = jax.random.split(key, 6)
    X = jax.random.normal(keys[0], (G, N, input_dim), jnp.float32)

    # Random undirected 0/1 adjacency; add self-loops (eye) when learn_eps=False,
    # matching __preprocess_neighbors_list_sumavepool.
    logits = jax.random.uniform(keys[1], (G, N, N))
    A = ((logits + jnp.swapaxes(logits, 1, 2)) > 1.0).astype(jnp.float32)
    A = A * (1.0 - jnp.eye(N, dtype=jnp.float32))
    adj = A + jnp.eye(N, dtype=jnp.float32) if not learn_eps else A

    # Deterministic parameter init (shapes from __init__):
    #   cppools[l].W : (input_dim + 1, rank_dim), xavier_uniform
    #   linears_prediction[l] : Linear(rank_dim, output_dim)
    fan_in = input_dim + 1
    xav = float(jnp.sqrt(6.0 / (fan_in + rank_dim)))
    W_cp = jax.random.uniform(
        keys[2], (num_layers, fan_in, rank_dim), jnp.float32, -xav, xav)
    lb = float(1.0 / jnp.sqrt(rank_dim))
    W_pred = jax.random.uniform(
        keys[3], (num_layers, output_dim, rank_dim), jnp.float32, -lb, lb)
    b_pred = jax.random.uniform(
        keys[4], (num_layers, output_dim), jnp.float32, -lb, lb)
    params = {"W_cp": W_cp, "W_pred": W_pred, "b_pred": b_pred}

    out = graph_cnn_forward(
        params, X, adj, neighbor_pooling_type=neighbor_pooling_type)
    out = jax.block_until_ready(out)

    ref = reference_forward(
        params, X, adj, neighbor_pooling_type=neighbor_pooling_type)
    assert out.shape == (G, output_dim), out.shape
    assert jnp.allclose(out, ref, rtol=1e-4, atol=1e-5), (out, ref)
    print("KERNEL_OK")
</pallas_src>

<mosaic_0001>
module attributes {stable_mosaic.version = 11 : i64} {
  func.func @fused_forward_kernel(%arg0: i32, %arg1: memref<1x16x16xbf16, #tpu.memory_space<vmem>>, %arg2: memref<1x16x7xf32, #tpu.memory_space<vmem>>, %arg3: memref<3x7x128xf32, #tpu.memory_space<vmem>>, %arg4: memref<3x1x128xf32, #tpu.memory_space<vmem>>, %arg5: memref<3x128x8xf32, #tpu.memory_space<vmem>>, %arg6: memref<1x8xf32, #tpu.memory_space<vmem>>, %arg7: memref<1x1x8xf32, #tpu.memory_space<vmem>>) attributes {dimension_semantics = [#tpu.dimension_semantics<parallel>], iteration_bounds = array<i64: 2>, scalar_prefetch = 0 : i64, scratch_operands = 0 : i64, tpu.core_type = #tpu.core_type<tc>, window_params = [{transform_indices = @transform_0, window_bounds = array<i64: 1, 16, 16>}, {transform_indices = @transform_1, window_bounds = array<i64: 1, 16, 7>}, {pipeline_mode = #tpu.pipeline_mode<synchronous>, transform_indices = @transform_2, window_bounds = array<i64: 3, 7, 128>}, {pipeline_mode = #tpu.pipeline_mode<synchronous>, transform_indices = @transform_3, window_bounds = array<i64: 3, 1, 128>}, {pipeline_mode = #tpu.pipeline_mode<synchronous>, transform_indices = @transform_4, window_bounds = array<i64: 3, 128, 8>}, {pipeline_mode = #tpu.pipeline_mode<synchronous>, transform_indices = @transform_5, window_bounds = array<i64: 1, 8>}, {transform_indices = @transform_6, window_bounds = array<i64: 1, 1, 8>}]} {
    %c0 = arith.constant 0 : index
    %c0_0 = arith.constant 0 : index
    %c0_1 = arith.constant 0 : index
    %0 = vector.load %arg1[%c0, %c0_0, %c0_1] : memref<1x16x16xbf16, #tpu.memory_space<vmem>>, vector<1x16x16xbf16>
    %1 = arith.extf %0 : vector<1x16x16xbf16> to vector<1x16x16xf32>
    %c0_2 = arith.constant 0 : index
    %c0_3 = arith.constant 0 : index
    %c0_4 = arith.constant 0 : index
    %2 = vector.load %arg2[%c0_2, %c0_3, %c0_4] : memref<1x16x7xf32, #tpu.memory_space<vmem>>, vector<1x16x7xf32>
    %cst = arith.constant 0.000000e+00 : f32
    %3 = vector.broadcast %cst : f32 to vector<1x8xf32>
    %c0_5 = arith.constant 0 : index
    %c0_6 = arith.constant 0 : index
    %c0_7 = arith.constant 0 : index
    %4 = vector.load %arg3[%c0_5, %c0_6, %c0_7] : memref<3x7x128xf32, #tpu.memory_space<vmem>>, vector<1x7x128xf32>
    %5 = vector.shape_cast %4 : vector<1x7x128xf32> to vector<7x128xf32>
    %c0_8 = arith.constant 0 : index
    %c0_9 = arith.constant 0 : index
    %c0_10 = arith.constant 0 : index
    %6 = vector.load %arg4[%c0_8, %c0_9, %c0_10] : memref<3x1x128xf32, #tpu.memory_space<vmem>>, vector<1x1x128xf32>
    %7 = vector.shape_cast %6 : vector<1x1x128xf32> to vector<1x128xf32>
    %8 = vector.shape_cast %2 : vector<1x16x7xf32> to vector<16x7xf32>
    %cst_11 = arith.constant dense<0.000000e+00> : vector<16x128xf32>
    %9 = tpu.matmul %8, %5, %cst_11 {dimension_numbers = #tpu.dot_dimension_numbers<[1], [0], [0], [1], [0, 0, 1, 1], [], []>} : vector<16x7xf32>, vector<7x128xf32>, vector<16x128xf32> -> vector<16x128xf32>
    %10 = vector.broadcast %7 : vector<1x128xf32> to vector<16x128xf32>
    %11 = arith.addf %9, %10 : vector<16x128xf32>
    %12 = math.tanh %11 : vector<16x128xf32>
    %13 = vector.shape_cast %12 : vector<16x128xf32> to vector<1x16x128xf32>
    %14 = vector.extract_strided_slice %13 {offsets = [0, 0, 0], sizes = [1, 8, 128], strides = [1, 1, 1]} : vector<1x16x128xf32> to vector<1x8x128xf32>
    %15 = vector.extract_strided_slice %13 {offsets = [0, 8, 0], sizes = [1, 8, 128], strides = [1, 1, 1]} : vector<1x16x128xf32> to vector<1x8x128xf32>
    %16 = arith.mulf %14, %15 : vector<1x8x128xf32>
    %17 = vector.extract_strided_slice %16 {offsets = [0, 0, 0], sizes = [1, 4, 128], strides = [1, 1, 1]} : vector<1x8x128xf32> to vector<1x4x128xf32>
    %18 = vector.extract_strided_slice %16 {offsets = [0, 4, 0], sizes = [1, 4, 128], strides = [1, 1, 1]} : vector<1x8x128xf32> to vector<1x4x128xf32>
    %19 = arith.mulf %17, %18 : vector<1x4x128xf32>
    %20 = vector.extract_strided_slice %19 {offsets = [0, 0, 0], sizes = [1, 2, 128], strides = [1, 1, 1]} : vector<1x4x128xf32> to vector<1x2x128xf32>
    %21 = vector.extract_strided_slice %19 {offsets = [0, 2, 0], sizes = [1, 2, 128], strides = [1, 1, 1]} : vector<1x4x128xf32> to vector<1x2x128xf32>
    %22 = arith.mulf %20, %21 : vector<1x2x128xf32>
    %23 = vector.extract_strided_slice %22 {offsets = [0, 0, 0], sizes = [1, 1, 128], strides = [1, 1, 1]} : vector<1x2x128xf32> to vector<1x1x128xf32>
    %24 = vector.extract_strided_slice %22 {offsets = [0, 1, 0], sizes = [1, 1, 128], strides = [1, 1, 1]} : vector<1x2x128xf32> to vector<1x1x128xf32>
    %25 = arith.mulf %23, %24 : vector<1x1x128xf32>
    %26 = vector.shape_cast %25 : vector<1x1x128xf32> to vector<1x128xf32>
    %c0_12 = arith.constant 0 : index
    %c0_13 = arith.constant 0 : index
    %c0_14 = arith.constant 0 : index
    %27 = vector.load %arg5[%c0_12, %c0_13, %c0_14] : memref<3x128x8xf32, #tpu.memory_space<vmem>>, vector<1x128x8xf32>
    %28 = vector.shape_cast %27 : vector<1x128x8xf32> to vector<128x8xf32>
    %cst_15 = arith.constant dense<0.000000e+00> : vector<1x8xf32>
    %29 = tpu.matmul %26, %28, %cst_15 {dimension_numbers = #tpu.dot_dimension_numbers<[1], [0], [0], [1], [0, 0, 1, 1], [], []>} : vector<1x128xf32>, vector<128x8xf32>, vector<1x8xf32> -> vector<1x8xf32>
    %30 = arith.addf %3, %29 : vector<1x8xf32>
    "tpu.trace_start"() <{level = 10 : i32, message = "gnm,gmd->gnd"}> : () -> ()
    %cst_16 = arith.constant dense<0.000000e+00> : vector<1x16x7xf32>
    %31 = tpu.matmul %1, %2, %cst_16 {dimension_numbers = #tpu.dot_dimension_numbers<[2], [1], [1], [2], [0, 0, 0, 1, 1, 2], [0], [0]>} : vector<1x16x16xf32>, vector<1x16x7xf32>, vector<1x16x7xf32> -> vector<1x16x7xf32>
    "tpu.trace_stop"() : () -> ()
    %c1 = arith.constant 1 : index
    %c0_17 = arith.constant 0 : index
    %c0_18 = arith.constant 0 : index
    %32 = vector.load %arg3[%c1, %c0_17, %c0_18] : memref<3x7x128xf32, #tpu.memory_space<vmem>>, vector<1x7x128xf32>
    %33 = vector.shape_cast %32 : vector<1x7x128xf32> to vector<7x128xf32>
    %c1_19 = arith.constant 1 : index
    %c0_20 = arith.constant 0 : index
    %c0_21 = arith.constant 0 : index
    %34 = vector.load %arg4[%c1_19, %c0_20, %c0_21] : memref<3x1x128xf32, #tpu.memory_space<vmem>>, vector<1x1x128xf32>
    %35 = vector.shape_cast %34 : vector<1x1x128xf32> to vector<1x128xf32>
    %36 = vector.shape_cast %31 : vector<1x16x7xf32> to vector<16x7xf32>
    %cst_22 = arith.constant dense<0.000000e+00> : vector<16x128xf32>
    %37 = tpu.matmul %36, %33, %cst_22 {dimension_numbers = #tpu.dot_dimension_numbers<[1], [0], [0], [1], [0, 0, 1, 1], [], []>} : vector<16x7xf32>, vector<7x128xf32>, vector<16x128xf32> -> vector<16x128xf32>
    %38 = vector.broadcast %35 : vector<1x128xf32> to vector<16x128xf32>
    %39 = arith.addf %37, %38 : vector<16x128xf32>
    %40 = math.tanh %39 : vector<16x128xf32>
    %41 = vector.shape_cast %40 : vector<16x128xf32> to vector<1x16x128xf32>
    %42 = vector.extract_strided_slice %41 {offsets = [0, 0, 0], sizes = [1, 8, 128], strides = [1, 1, 1]} : vector<1x16x128xf32> to vector<1x8x128xf32>
    %43 = vector.extract_strided_slice %41 {offsets = [0, 8, 0], sizes = [1, 8, 128], strides = [1, 1, 1]} : vector<1x16x128xf32> to vector<1x8x128xf32>
    %44 = arith.mulf %42, %43 : vector<1x8x128xf32>
    %45 = vector.extract_strided_slice %44 {offsets = [0, 0, 0], sizes = [1, 4, 128], strides = [1, 1, 1]} : vector<1x8x128xf32> to vector<1x4x128xf32>
    %46 = vector.extract_strided_slice %44 {offsets = [0, 4, 0], sizes = [1, 4, 128], strides = [1, 1, 1]} : vector<1x8x128xf32> to vector<1x4x128xf32>
    %47 = arith.mulf %45, %46 : vector<1x4x128xf32>
    %48 = vector.extract_strided_slice %47 {offsets = [0, 0, 0], sizes = [1, 2, 128], strides = [1, 1, 1]} : vector<1x4x128xf32> to vector<1x2x128xf32>
    %49 = vector.extract_strided_slice %47 {offsets = [0, 2, 0], sizes = [1, 2, 128], strides = [1, 1, 1]} : vector<1x4x128xf32> to vector<1x2x128xf32>
    %50 = arith.mulf %48, %49 : vector<1x2x128xf32>
    %51 = vector.extract_strided_slice %50 {offsets = [0, 0, 0], sizes = [1, 1, 128], strides = [1, 1, 1]} : vector<1x2x128xf32> to vector<1x1x128xf32>
    %52 = vector.extract_strided_slice %50 {offsets = [0, 1, 0], sizes = [1, 1, 128], strides = [1, 1, 1]} : vector<1x2x128xf32> to vector<1x1x128xf32>
    %53 = arith.mulf %51, %52 : vector<1x1x128xf32>
    %54 = vector.shape_cast %53 : vector<1x1x128xf32> to vector<1x128xf32>
    %c1_23 = arith.constant 1 : index
    %c0_24 = arith.constant 0 : index
    %c0_25 = arith.constant 0 : index
    %55 = vector.load %arg5[%c1_23, %c0_24, %c0_25] : memref<3x128x8xf32, #tpu.memory_space<vmem>>, vector<1x128x8xf32>
    %56 = vector.shape_cast %55 : vector<1x128x8xf32> to vector<128x8xf32>
    %cst_26 = arith.constant dense<0.000000e+00> : vector<1x8xf32>
    %57 = tpu.matmul %54, %56, %cst_26 {dimension_numbers = #tpu.dot_dimension_numbers<[1], [0], [0], [1], [0, 0, 1, 1], [], []>} : vector<1x128xf32>, vector<128x8xf32>, vector<1x8xf32> -> vector<1x8xf32>
    %58 = arith.addf %30, %57 : vector<1x8xf32>
    "tpu.trace_start"() <{level = 10 : i32, message = "gnm,gmd->gnd"}> : () -> ()
    %cst_27 = arith.constant dense<0.000000e+00> : vector<1x16x7xf32>
    %59 = tpu.matmul %1, %31, %cst_27 {dimension_numbers = #tpu.dot_dimension_numbers<[2], [1], [1], [2], [0, 0, 0, 1, 1, 2], [0], [0]>} : vector<1x16x16xf32>, vector<1x16x7xf32>, vector<1x16x7xf32> -> vector<1x16x7xf32>
    "tpu.trace_stop"() : () -> ()
    %c2 = arith.constant 2 : index
    %c0_28 = arith.constant 0 : index
    %c0_29 = arith.constant 0 : index
    %60 = vector.load %arg3[%c2, %c0_28, %c0_29] : memref<3x7x128xf32, #tpu.memory_space<vmem>>, vector<1x7x128xf32>
    %61 = vector.shape_cast %60 : vector<1x7x128xf32> to vector<7x128xf32>
    %c2_30 = arith.constant 2 : index
    %c0_31 = arith.constant 0 : index
    %c0_32 = arith.constant 0 : index
    %62 = vector.load %arg4[%c2_30, %c0_31, %c0_32] : memref<3x1x128xf32, #tpu.memory_space<vmem>>, vector<1x1x128xf32>
    %63 = vector.shape_cast %62 : vector<1x1x128xf32> to vector<1x128xf32>
    %64 = vector.shape_cast %59 : vector<1x16x7xf32> to vector<16x7xf32>
    %cst_33 = arith.constant dense<0.000000e+00> : vector<16x128xf32>
    %65 = tpu.matmul %64, %61, %cst_33 {dimension_numbers = #tpu.dot_dimension_numbers<[1], [0], [0], [1], [0, 0, 1, 1], [], []>} : vector<16x7xf32>, vector<7x128xf32>, vector<16x128xf32> -> vector<16x128xf32>
    %66 = vector.broadcast %63 : vector<1x128xf32> to vector<16x128xf32>
    %67 = arith.addf %65, %66 : vector<16x128xf32>
    %68 = math.tanh %67 : vector<16x128xf32>
    %69 = vector.shape_cast %68 : vector<16x128xf32> to vector<1x16x128xf32>
    %70 = vector.extract_strided_slice %69 {offsets = [0, 0, 0], sizes = [1, 8, 128], strides = [1, 1, 1]} : vector<1x16x128xf32> to vector<1x8x128xf32>
    %71 = vector.extract_strided_slice %69 {offsets = [0, 8, 0], sizes = [1, 8, 128], strides = [1, 1, 1]} : vector<1x16x128xf32> to vector<1x8x128xf32>
    %72 = arith.mulf %70, %71 : vector<1x8x128xf32>
    %73 = vector.extract_strided_slice %72 {offsets = [0, 0, 0], sizes = [1, 4, 128], strides = [1, 1, 1]} : vector<1x8x128xf32> to vector<1x4x128xf32>
    %74 = vector.extract_strided_slice %72 {offsets = [0, 4, 0], sizes = [1, 4, 128], strides = [1, 1, 1]} : vector<1x8x128xf32> to vector<1x4x128xf32>
    %75 = arith.mulf %73, %74 : vector<1x4x128xf32>
    %76 = vector.extract_strided_slice %75 {offsets = [0, 0, 0], sizes = [1, 2, 128], strides = [1, 1, 1]} : vector<1x4x128xf32> to vector<1x2x128xf32>
    %77 = vector.extract_strided_slice %75 {offsets = [0, 2, 0], sizes = [1, 2, 128], strides = [1, 1, 1]} : vector<1x4x128xf32> to vector<1x2x128xf32>
    %78 = arith.mulf %76, %77 : vector<1x2x128xf32>
    %79 = vector.extract_strided_slice %78 {offsets = [0, 0, 0], sizes = [1, 1, 128], strides = [1, 1, 1]} : vector<1x2x128xf32> to vector<1x1x128xf32>
    %80 = vector.extract_strided_slice %78 {offsets = [0, 1, 0], sizes = [1, 1, 128], strides = [1, 1, 1]} : vector<1x2x128xf32> to vector<1x1x128xf32>
    %81 = arith.mulf %79, %80 : vector<1x1x128xf32>
    %82 = vector.shape_cast %81 : vector<1x1x128xf32> to vector<1x128xf32>
    %c2_34 = arith.constant 2 : index
    %c0_35 = arith.constant 0 : index
    %c0_36 = arith.constant 0 : index
    %83 = vector.load %arg5[%c2_34, %c0_35, %c0_36] : memref<3x128x8xf32, #tpu.memory_space<vmem>>, vector<1x128x8xf32>
    %84 = vector.shape_cast %83 : vector<1x128x8xf32> to vector<128x8xf32>
    %cst_37 = arith.constant dense<0.000000e+00> : vector<1x8xf32>
    %85 = tpu.matmul %82, %84, %cst_37 {dimension_numbers = #tpu.dot_dimension_numbers<[1], [0], [0], [1], [0, 0, 1, 1], [], []>} : vector<1x128xf32>, vector<128x8xf32>, vector<1x8xf32> -> vector<1x8xf32>
    %86 = arith.addf %58, %85 : vector<1x8xf32>
    %c0_38 = arith.constant 0 : index
    %c0_39 = arith.constant 0 : index
    %87 = vector.load %arg6[%c0_38, %c0_39] : memref<1x8xf32, #tpu.memory_space<vmem>>, vector<1x8xf32>
    %88 = arith.addf %86, %87 : vector<1x8xf32>
    %89 = vector.shape_cast %88 : vector<1x8xf32> to vector<1x1x8xf32>
    %c0_40 = arith.constant 0 : index
    %c0_41 = arith.constant 0 : index
    %c0_42 = arith.constant 0 : index
    %90 = vector.load %arg7[%c0_40, %c0_41, %c0_42] : memref<1x1x8xf32, #tpu.memory_space<vmem>>, vector<1x1x8xf32>
    tpu.vector_store %arg7[%c0_40, %c0_41, %c0_42], %89 {strides = array<i32>} : memref<1x1x8xf32, #tpu.memory_space<vmem>>, vector<1x1x8xf32>,
    return
  }
  func.func @transform_0(%arg0: i32) -> (i32, i32, i32) {
    %c0_i32 = arith.constant 0 : i32
    %c0_i32_0 = arith.constant 0 : i32
    %c0_i32_1 = arith.constant 0 : i32
    return %arg0, %c0_i32, %c0_i32_0 : i32, i32, i32
  }
  func.func @transform_1(%arg0: i32) -> (i32, i32, i32) {
    %c0_i32 = arith.constant 0 : i32
    %c0_i32_0 = arith.constant 0 : i32
    %c0_i32_1 = arith.constant 0 : i32
    return %arg0, %c0_i32, %c0_i32_0 : i32, i32, i32
  }
  func.func @transform_2(%arg0: i32) -> (i32, i32, i32) {
    %c0_i32 = arith.constant 0 : i32
    %c0_i32_0 = arith.constant 0 : i32
    %c0_i32_1 = arith.constant 0 : i32
    %c0_i32_2 = arith.constant 0 : i32
    return %c0_i32, %c0_i32_0, %c0_i32_1 : i32, i32, i32
  }
  func.func @transform_3(%arg0: i32) -> (i32, i32, i32) {
    %c0_i32 = arith.constant 0 : i32
    %c0_i32_0 = arith.constant 0 : i32
    %c0_i32_1 = arith.constant 0 : i32
    %c0_i32_2 = arith.constant 0 : i32
    return %c0_i32, %c0_i32_0, %c0_i32_1 : i32, i32, i32
  }
  func.func @transform_4(%arg0: i32) -> (i32, i32, i32) {
    %c0_i32 = arith.constant 0 : i32
    %c0_i32_0 = arith.constant 0 : i32
    %c0_i32_1 = arith.constant 0 : i32
    %c0_i32_2 = arith.constant 0 : i32
    return %c0_i32, %c0_i32_0, %c0_i32_1 : i32, i32, i32
  }
  func.func @transform_5(%arg0: i32) -> (i32, i32) {
    %c0_i32 = arith.constant 0 : i32
    %c0_i32_0 = arith.constant 0 : i32
    %c0_i32_1 = arith.constant 0 : i32
    return %c0_i32, %c0_i32_0 : i32, i32
  }
  func.func @transform_6(%arg0: i32) -> (i32, i32, i32) {
    %c0_i32 = arith.constant 0 : i32
    %c0_i32_0 = arith.constant 0 : i32
    %c0_i32_1 = arith.constant 0 : i32
    return %arg0, %c0_i32, %c0_i32_0 : i32, i32, i32
  }
}

</mosaic_0001>

<llo_original>
// kernel: tpu_custom_call.1
$region0: #{tpu_custom_call.1}
  #allocation0 [shape = 'u32[]', space=smem, size = 0x4, offset = 0x4, fixed_abs, tag = 'smem constant byte address 0x4 - core index']
  #allocation1 [shape = 'u32[144,128]{1,0:T(1,128)}', space=vmem, size = 0x12000, scoped, tag = 'internal scratch']
  %s0 = inlined_call_operand.vmem [shape: bf16[2,16,16], index: 0, kind: input, shape index: {}]
  %s1 = inlined_call_operand.vmem [shape: f32[2,16,7], index: 1, kind: input, shape index: {}]
  %s2 = inlined_call_operand.vmem [shape: f32[3,7,128], index: 2, kind: input, shape index: {}]
  %s3 = inlined_call_operand.vmem [shape: f32[3,1,128], index: 3, kind: input, shape index: {}]
  %s4 = inlined_call_operand.vmem [shape: f32[3,128,8], index: 4, kind: input, shape index: {}]
  %s5 = inlined_call_operand.vmem [shape: f32[1,8], index: 5, kind: input, shape index: {}]
  %s6 = inlined_call_operand.hbm [shape: f32[2,1,8], index: 6, kind: output, shape index: {}]
  %s7 = sld [smem:[#allocation0]]
  $region57: #{tpu_custom_call.1} parent=0
    _
  %s9 = ssub.s32 1, %s7
  %s10 = scalar_select 0, %s9, %s7
  $region1: #{tpu_custom_call.1} parent=0
    #allocation2 [shape = 'u8[1024]{0}', space=vmem, size = 0x400, scoped, tag = 'output window, operand 0']
    #allocation3 [shape = 's32[2]{0}', space=sflag, size = 0x8, scoped, tag = 'scoped memory for tpu_custom_call.1']
    %11 = vsyncpa [#allocation3], 0
    %s12 = scalar_lea.sflag [#allocation3], 1
    %13 = vsyncpa %s12, 0
    loop: start=0, step=1, limit=4
    $region2: #{tpu_custom_call.1} parent=1 // loop_pre_header
      _
    $region3: #{tpu_custom_call.1} parent=1 // loop_header
      %s15 = sphi 0, %s19
      %p16 = scmp.ge.s32.totalorder %s15, 4
      %s25 = sphi 0, %s27
      %s28 = sphi 0, %s25
      %s29 = sphi 0, %s28
      %s45 = sphi 0, %s29
      %s51 = sphi 0, %s53
      %s54 = sphi 0, %s51
      %s55 = sphi 0, %s54
      %s71 = sphi 0, %s55
      %s75 = sphi 0, %s75
      %s77 = sphi 0, %s75
      %s78 = sphi 0, %s77
      %s92 = sphi 0, %s78
      %s96 = sphi 0, %s96
      %s98 = sphi 0, %s96
      %s99 = sphi 0, %s98
      %s113 = sphi 0, %s99
      %s117 = sphi 0, %s117
      %s119 = sphi 0, %s117
      %s120 = sphi 0, %s119
      %s134 = sphi 0, %s120
      %s138 = sphi 0, %s138
      %s140 = sphi 0, %s138
      %s141 = sphi 0, %s140
      %s155 = sphi 0, %s141
      %s161 = sphi 0, %s163
      %s164 = sphi 0, %s161
      %s165 = sphi 0, %s164
      %s181 = sphi 0, %s165
    $region4: #{tpu_custom_call.1} parent=1 // loop_header_branch
      %18 = sbr.rel (%p16) target = $region8
    $region5: #{tpu_custom_call.1} parent=1 // loop_body
      %s20 = ssub.s32 %s15, 1
      %s21 = ssub.s32 %s15, 2
      %s22 = sadd.s32 %s15, 1
      %s23 = ssub.s32 %s15, %s22
      %p24 = scmp.eq.s32.totalorder %s23, 0
      %s26 = sadd.s32 %s25, 1
      %s27 = scalar_select %p24, %s25, %s26
      %p30 = pneg %p24
      %p31 = scmp.eq.s32.totalorder %s15, 1
      %p32 = por %p30, %p31
      %p33 = scmp.ne.s32.totalorder %s25, %s28
      %p34 = scmp.eq.s32.totalorder %s15, 0
      %p35 = por %p33, %p34
      %p36 = scmp.ne.s32.totalorder %s25, %s28
      %p37 = scmp.eq.s32.totalorder %s20, 1
      %p38 = por %p36, %p37
      %p39 = scmp.ne.s32.totalorder %s28, %s29
      %p40 = scmp.eq.s32.totalorder %s20, 0
      %p41 = por %p39, %p40
      %p42 = scmp.ne.s32.totalorder %s28, %s29
      %p43 = scmp.eq.s32.totalorder %s21, 1
      %p44 = por %p42, %p43
      %p46 = scmp.ne.s32.totalorder %s29, %s45
      %p47 = scmp.eq.s32.totalorder %s21, 0
      %p48 = por %p46, %p47
      %s49 = ssub.s32 %s15, %s22
      %p50 = scmp.eq.s32.totalorder %s49, 0
      %s52 = sadd.s32 %s51, 1
      %s53 = scalar_select %p50, %s51, %s52
      %p56 = pneg %p50
      %p57 = scmp.eq.s32.totalorder %s15, 1
      %p58 = por %p56, %p57
      %p59 = scmp.ne.s32.totalorder %s51, %s54
      %p60 = scmp.eq.s32.totalorder %s15, 0
      %p61 = por %p59, %p60
      %p62 = scmp.ne.s32.totalorder %s51, %s54
      %p63 = scmp.eq.s32.totalorder %s20, 1
      %p64 = por %p62, %p63
      %p65 = scmp.ne.s32.totalorder %s54, %s55
      %p66 = scmp.eq.s32.totalorder %s20, 0
      %p67 = por %p65, %p66
      %p68 = scmp.ne.s32.totalorder %s54, %s55
      %p69 = scmp.eq.s32.totalorder %s21, 1
      %p70 = por %p68, %p69
      %p72 = scmp.ne.s32.totalorder %s55, %s71
      %p73 = scmp.eq.s32.totalorder %s21, 0
      %p74 = por %p72, %p73
      %s76 = sadd.s32 %s75, 1
      %p79 = scmp.eq.s32.totalorder %s15, 1
      %p80 = scmp.ne.s32.totalorder %s75, %s77
      %p81 = scmp.eq.s32.totalorder %s15, 0
      %p82 = por %p80, %p81
      %p83 = scmp.ne.s32.totalorder %s75, %s77
      %p84 = scmp.eq.s32.totalorder %s20, 1
      %p85 = por %p83, %p84
      %p86 = scmp.ne.s32.totalorder %s77, %s78
      %p87 = scmp.eq.s32.totalorder %s20, 0
      %p88 = por %p86, %p87
      %p89 = scmp.ne.s32.totalorder %s77, %s78
      %p90 = scmp.eq.s32.totalorder %s21, 1
      %p91 = por %p89, %p90
      %p93 = scmp.ne.s32.totalorder %s78, %s92
      %p94 = scmp.eq.s32.totalorder %s21, 0
      %p95 = por %p93, %p94
      %s97 = sadd.s32 %s96, 1
      %p100 = scmp.eq.s32.totalorder %s15, 1
      %p101 = scmp.ne.s32.totalorder %s96, %s98
      %p102 = scmp.eq.s32.totalorder %s15, 0
      %p103 = por %p101, %p102
      %p104 = scmp.ne.s32.totalorder %s96, %s98
      %p105 = scmp.eq.s32.totalorder %s20, 1
      %p106 = por %p104, %p105
      %p107 = scmp.ne.s32.totalorder %s98, %s99
      %p108 = scmp.eq.s32.totalorder %s20, 0
      %p109 = por %p107, %p108
      %p110 = scmp.ne.s32.totalorder %s98, %s99
      %p111 = scmp.eq.s32.totalorder %s21, 1
      %p112 = por %p110, %p111
      %p114 = scmp.ne.s32.totalorder %s99, %s113
      %p115 = scmp.eq.s32.totalorder %s21, 0
      %p116 = por %p114, %p115
      %s118 = sadd.s32 %s117, 1
      %p121 = scmp.eq.s32.totalorder %s15, 1
      %p122 = scmp.ne.s32.totalorder %s117, %s119
      %p123 = scmp.eq.s32.totalorder %s15, 0
      %p124 = por %p122, %p123
      %p125 = scmp.ne.s32.totalorder %s117, %s119
      %p126 = scmp.eq.s32.totalorder %s20, 1
      %p127 = por %p125, %p126
      %p128 = scmp.ne.s32.totalorder %s119, %s120
      %p129 = scmp.eq.s32.totalorder %s20, 0
      %p130 = por %p128, %p129
      %p131 = scmp.ne.s32.totalorder %s119, %s120
      %p132 = scmp.eq.s32.totalorder %s21, 1
      %p133 = por %p131, %p132
      %p135 = scmp.ne.s32.totalorder %s120, %s134
      %p136 = scmp.eq.s32.totalorder %s21, 0
      %p137 = por %p135, %p136
      %s139 = sadd.s32 %s138, 1
      %p142 = scmp.eq.s32.totalorder %s15, 1
      %p143 = scmp.ne.s32.totalorder %s138, %s140
      %p144 = scmp.eq.s32.totalorder %s15, 0
      %p145 = por %p143, %p144
      %p146 = scmp.ne.s32.totalorder %s138, %s140
      %p147 = scmp.eq.s32.totalorder %s20, 1
      %p148 = por %p146, %p147
      %p149 = scmp.ne.s32.totalorder %s140, %s141
      %p150 = scmp.eq.s32.totalorder %s20, 0
      %p151 = por %p149, %p150
      %p152 = scmp.ne.s32.totalorder %s140, %s141
      %p153 = scmp.eq.s32.totalorder %s21, 1
      %p154 = por %p152, %p153
      %p156 = scmp.ne.s32.totalorder %s141, %s155
      %p157 = scmp.eq.s32.totalorder %s21, 0
      %p158 = por %p156, %p157
      %s159 = ssub.s32 %s15, %s22
      %p160 = scmp.eq.s32.totalorder %s159, 0
      %s162 = sadd.s32 %s161, 1
      %s163 = scalar_select %p160, %s161, %s162
      %p166 = pneg %p160
      %p167 = scmp.eq.s32.totalorder %s15, 1
      %p168 = por %p166, %p167
      %p169 = scmp.ne.s32.totalorder %s161, %s164
      %p170 = scmp.eq.s32.totalorder %s15, 0
      %p171 = por %p169, %p170
      %p172 = scmp.ne.s32.totalorder %s161, %s164
      %p173 = scmp.eq.s32.totalorder %s20, 1
      %p174 = por %p172, %p173
      %p175 = scmp.ne.s32.totalorder %s164, %s165
      %p176 = scmp.eq.s32.totalorder %s20, 0
      %p177 = por %p175, %p176
      %p178 = scmp.ne.s32.totalorder %s164, %s165
      %p179 = scmp.eq.s32.totalorder %s21, 1
      %p180 = por %p178, %p179
      %p182 = scmp.ne.s32.totalorder %s165, %s181
      %p183 = scmp.eq.s32.totalorder %s21, 0
      %p184 = por %p182, %p183
      %p185 = scmp.le.s32.totalorder 1, %s15
      %p186 = scmp.lt.s32.totalorder %s15, 3
      %p187 = pnand %p185, %p186
      %p188 = pneg %p187
      // Predicated region
      $region9: #{tpu_custom_call.1} parent=5 // pred_check
        _
      $region10: #{tpu_custom_call.1} parent=5 // pred_check_branch
        %190 = sbr.rel (%p187) target = $region12
      $region11: #{tpu_custom_call.1} parent=5 // pred_region
        %s191 = ssub.s32 %s15, 1
        // Predicated region
        $region13: #{tpu_custom_call.1} parent=11 // pred_check
          %p192 = pneg %p88
        $region14: #{tpu_custom_call.1} parent=11 // pred_check_branch
          %194 = sbr.rel (%p192) target = $region16
        $region15: #{tpu_custom_call.1} parent=11 // pred_region
          _
        $region16: #{tpu_custom_call.1} parent=11 // pred_fallthru
          _
        // Predicated region
        $region17: #{tpu_custom_call.1} parent=11 // pred_check
          %p195 = pneg %p109
        $region18: #{tpu_custom_call.1} parent=11 // pred_check_branch
          %197 = sbr.rel (%p195) target = $region20
        $region19: #{tpu_custom_call.1} parent=11 // pred_region
          _
        $region20: #{tpu_custom_call.1} parent=11 // pred_fallthru
          _
        // Predicated region
        $region21: #{tpu_custom_call.1} parent=11 // pred_check
          %p198 = pneg %p130
        $region22: #{tpu_custom_call.1} parent=11 // pred_check_branch
          %200 = sbr.rel (%p198) target = $region24
        $region23: #{tpu_custom_call.1} parent=11 // pred_region
          _
        $region24: #{tpu_custom_call.1} parent=11 // pred_fallthru
          _
        // Predicated region
        $region25: #{tpu_custom_call.1} parent=11 // pred_check
          %p201 = pneg %p151
        $region26: #{tpu_custom_call.1} parent=11 // pred_check_branch
          %203 = sbr.rel (%p201) target = $region28
        $region27: #{tpu_custom_call.1} parent=11 // pred_region
          _
        $region28: #{tpu_custom_call.1} parent=11 // pred_fallthru
          _
      $region12: #{tpu_custom_call.1} parent=5 // pred_fallthru
        _
      %p204 = scmp.lt.s32.totalorder %s15, 2
      // Predicated region
      $region29: #{tpu_custom_call.1} parent=5 // pred_check
        %p205 = pneg %p204
      $region30: #{tpu_custom_call.1} parent=5 // pred_check_branch
        %207 = sbr.rel (%p205) target = $region32
      $region31: #{tpu_custom_call.1} parent=5 // pred_region
        // Predicated region
        $region33: #{tpu_custom_call.1} parent=31 // pred_check
          %p208 = pneg %p35
        $region34: #{tpu_custom_call.1} parent=31 // pred_check_branch
          %210 = sbr.rel (%p208) target = $region36
        $region35: #{tpu_custom_call.1} parent=31 // pred_region
          %p211 = scmp.lt.s32.totalorder %s15, 1
          %s212 = scalar_select %p211, %s15, 1
          %s213 = smul.addr %s212, 2
          %s214 = smul.addr %s213, 4
          %s215 = scalar_lea.vmem %s0, %s214
        $region36: #{tpu_custom_call.1} parent=31 // pred_fallthru
          _
        // Predicated region
        $region37: #{tpu_custom_call.1} parent=31 // pred_check
          %p216 = pneg %p61
        $region38: #{tpu_custom_call.1} parent=31 // pred_check_branch
          %218 = sbr.rel (%p216) target = $region40
        $region39: #{tpu_custom_call.1} parent=31 // pred_region
          %p219 = scmp.lt.s32.totalorder %s15, 1
          %s220 = scalar_select %p219, %s15, 1
          %s221 = smul.addr %s220, 2
          %s222 = smul.addr %s221, 8
          %s223 = scalar_lea.vmem %s1, %s222
        $region40: #{tpu_custom_call.1} parent=31 // pred_fallthru
          _
      $region32: #{tpu_custom_call.1} parent=5 // pred_fallthru
        _
      %p224 = scmp.le.s32.totalorder 1, %s15
      %p225 = scmp.lt.s32.totalorder %s15, 3
      %p226 = pnand %p224, %p225
      %p227 = pneg %p226
      // Predicated region
      $region41: #{tpu_custom_call.1} parent=5 // pred_check
        _
      $region42: #{tpu_custom_call.1} parent=5 // pred_check_branch
        %229 = sbr.rel (%p226) target = $region44
      $region43: #{tpu_custom_call.1} parent=5 // pred_region
        %s230 = ssub.s32 %s15, 1
        %p231 = scmp.lt.s32.totalorder %s20, 1
        %s232 = scalar_select %p231, %s20, 1
        %s233 = smul.addr %s232, 2
        %s234 = smul.addr %s233, 4
        %s235 = scalar_lea.vmem %s0, %s234
        %p236 = pneg %p41
        %p237 = pneg %p38
        %p238 = scmp.lt.s32.totalorder %s20, 1
        %s239 = scalar_select %p238, %s20, 1
        %s240 = smul.addr %s239, 2
        %s241 = smul.addr %s240, 8
        %s242 = scalar_lea.vmem %s1, %s241
        %p243 = pneg %p67
        %p244 = pneg %p64
        %p245 = pneg %p88
        %p246 = pneg %p85
        %p247 = pneg %p109
        %p248 = pneg %p106
        %p249 = pneg %p130
        %p250 = pneg %p127
        %p251 = pneg %p151
        %p252 = pneg %p148
        %p253 = pneg %p177
        %p254 = pneg %p174
        %s255 = sand.u32 %s164, 1
        %s256 = scalar_lea.sflag [#allocation3], %s255
        %s257 = sand.u32 %s164, 1
        %s258 = scalar_lea.vmem [#allocation2], %s257
        %p259 = scmp.lt.s32.totalorder %s20, 1
        %s260 = scalar_select %p259, %s20, 1
        %s261 = smul.addr %s260, 2
        %s262 = smul.addr %s261, 4
        %s263 = scalar_lea.vmem %s0, %s262
        %p264 = scmp.lt.s32.totalorder %s20, 1
        %s265 = scalar_select %p264, %s20, 1
        %s266 = smul.addr %s265, 2
        %s267 = smul.addr %s266, 8
        %s268 = scalar_lea.vmem %s1, %s267
        %v269 = vld [vmem:[%s263] sm:$0xf]
        %v270 = vld [vmem:[%s263 + $0x4] sm:$0xf]
        %v271 = vunpack.c.l.bf16 %v269
        %v272 = vunpack.c.l.bf16 %v270
        %v273 = vld [vmem:[%s268] sm:$0xff]
        %v274 = vld [vmem:[%s268 + $0x8] sm:$0xff]
        %v275 = vld [vmem:[%s2] sm:$0x7f]
        %v276 = vld [vmem:[%s3] sm:$0x1]
        %v278 = vlaneseq
        %v279 = vshrl.u32 %v278, 7
        %v280 = vsub.s32 0, %v279
        %v281 = vrot.slane %v276, %v280
        %vm283 = vcmask 56320
        %v285 = vsel %vm283, %v273, 0
        %v288 = vsel %vm283, %v274, 0
        %vm290 = vcmask 1046528
        %v292 = vsel %vm290, %v275, 0
        %294 = vmatprep.subr.mxu0 0.0
        %295 = vmatpush1.msra.mxu0 0.0
        %296 = vmatprep.subr.mxu0 0.0
        %297 = vmatpush1.msra.mxu0 0.0
        %298 = vmatprep.subr.mxu0 0.0
        %299 = vmatpush1.msra.mxu0 0.0
        %300 = vmatprep.subr.mxu0 0.0
        %301 = vmatpush1.msra.mxu0 0.0
        %302 = vmatprep.subr.mxu0 0.0
        %303 = vmatpush1.msra.mxu0 0.0
        %304 = vmatprep.subr.mxu0 0.0
        %305 = vmatpush1.msra.mxu0 0.0
        %306 = vmatprep.subr.mxu0 0.0
        %307 = vmatpush1.msra.mxu0 0.0
        %308 = vmatprep.subr.mxu0 0.0
        %309 = vmatpush1.msra.mxu0 0.0
        %310 = vmatprep.subr.mxu0 0.0
        %311 = vmatpush1.msra.mxu0 0.0
        %312 = vmatprep.subr.mxu0 0.0
        %313 = vmatpush1.msra.mxu0 0.0
        %314 = vmatprep.subr.mxu0 0.0
        %315 = vmatpush1.msra.mxu0 0.0
        %316 = vmatprep.subr.mxu0 0.0
        %317 = vmatpush1.msra.mxu0 0.0
        %318 = vmatprep.subr.mxu0 0.0
        %319 = vmatpush1.msra.mxu0 0.0
        %320 = vmatprep.subr.mxu0 0.0
        %321 = vmatpush1.msra.mxu0 0.0
        %322 = vmatprep.subr.mxu0 0.0
        %323 = vmatpush1.msra.mxu0 0.0
        %324 = vmatprep.subr.mxu0 0.0
        %325 = vmatpush1.msra.mxu0 %v292
        %326 = vmatprep.subr.mxu0 0.0
        %327 = vmatpush2.msra.mxu0 0.0
        %328 = vmatprep.subr.mxu0 0.0
        %329 = vmatpush2.msra.mxu0 0.0
        %330 = vmatprep.subr.mxu0 0.0
        %331 = vmatpush2.msra.mxu0 0.0
        %332 = vmatprep.subr.mxu0 0.0
        %333 = vmatpush2.msra.mxu0 0.0
        %334 = vmatprep.subr.mxu0 0.0
        %335 = vmatpush2.msra.mxu0 0.0
        %336 = vmatprep.subr.mxu0 0.0
        %337 = vmatpush2.msra.mxu0 0.0
        %338 = vmatprep.subr.mxu0 0.0
        %339 = vmatpush2.msra.mxu0 0.0
        %340 = vmatprep.subr.mxu0 0.0
        %341 = vmatpush2.msra.mxu0 0.0
        %342 = vmatprep.subr.mxu0 0.0
        %343 = vmatpush2.msra.mxu0 0.0
        %344 = vmatprep.subr.mxu0 0.0
        %345 = vmatpush2.msra.mxu0 0.0
        %346 = vmatprep.subr.mxu0 0.0
        %347 = vmatpush2.msra.mxu0 0.0
        %348 = vmatprep.subr.mxu0 0.0
        %349 = vmatpush2.msra.mxu0 0.0
        %350 = vmatprep.subr.mxu0 0.0
        %351 = vmatpush2.msra.mxu0 0.0
        %352 = vmatprep.subr.mxu0 0.0
        %353 = vmatpush2.msra.mxu0 0.0
        %354 = vmatprep.subr.mxu0 0.0
        %355 = vmatpush2.msra.mxu0 0.0
        %356 = vmatprep.subr.mxu0 0.0
        %357 = vmatpush2.msra.mxu0 0.0
        %358 = vmatprep.mubr.f32.mxu0 0.0
        %359 = vmatmul.mubr.f32.gmra.mxu0 %v285
        %v360 = vpop.f32.mrf.mxu0
        %v361 = vadd.f32 %v281, %v360
        %v362 = vpop.f32.mrf.mxu0
        %363 = vmatprep.mubr.f32.mxu0 0.0
        %364 = vmatmul.mubr.f32.gmra.mxu0 %v288
        %v365 = vpop.f32.mrf.mxu0
        %v366 = vadd.f32 %v281, %v365
        %v367 = vpop.f32.mrf.mxu0
        %368 = vdwg.mxu0
        %v369 = vtanh.pop %v361
        %v370 = vtanh.pop %v366
        %v371 = vmul.f32 %v369, %v370
        %v373 = vrot.slane %v371, 4
        %v375 = vmul.f32 %v371, %v373
        %v377 = vrot.slane %v375, 2
        %v379 = vmul.f32 %v375, %v377
        %v381 = vrot.slane %v379, 1
        %v383 = vmul.f32 %v379, %v381
        %v384 = vld [vmem:[%s4] sm:$0xff]
        %v385 = vld [vmem:[%s4 + $0x8] sm:$0xff]
        %v386 = vld [vmem:[%s4 + $0x10] sm:$0xff]
        %v387 = vld [vmem:[%s4 + $0x18] sm:$0xff]
        %v388 = vld [vmem:[%s4 + $0x20] sm:$0xff]
        %v389 = vld [vmem:[%s4 + $0x28] sm:$0xff]
        %v390 = vld [vmem:[%s4 + $0x30] sm:$0xff]
        %v391 = vld [vmem:[%s4 + $0x38] sm:$0xff]
        %v392 = vld [vmem:[%s4 + $0x40] sm:$0xff]
        %v393 = vld [vmem:[%s4 + $0x48] sm:$0xff]
        %v394 = vld [vmem:[%s4 + $0x50] sm:$0xff]
        %v395 = vld [vmem:[%s4 + $0x58] sm:$0xff]
        %v396 = vld [vmem:[%s4 + $0x60] sm:$0xff]
        %v397 = vld [vmem:[%s4 + $0x68] sm:$0xff]
        %v398 = vld [vmem:[%s4 + $0x70] sm:$0xff]
        %v399 = vld [vmem:[%s4 + $0x78] sm:$0xff]
        %vm400 = vcmask 130048
        %v402 = vsel %vm400, %v271, 0
        %v405 = vsel %vm400, %v272, 0
        %407 = vmatprep.subr.mxu0 0.0
        %408 = vmatpush1.msra.mxu0 0.0
        %409 = vmatprep.subr.mxu0 0.0
        %410 = vmatpush1.msra.mxu0 0.0
        %411 = vmatprep.subr.mxu0 0.0
        %412 = vmatpush1.msra.mxu0 0.0
        %413 = vmatprep.subr.mxu0 0.0
        %414 = vmatpush1.msra.mxu0 0.0
        %415 = vmatprep.subr.mxu0 0.0
        %416 = vmatpush1.msra.mxu0 0.0
        %417 = vmatprep.subr.mxu0 0.0
        %418 = vmatpush1.msra.mxu0 0.0
        %419 = vmatprep.subr.mxu0 0.0
        %420 = vmatpush1.msra.mxu0 0.0
        %421 = vmatprep.subr.mxu0 0.0
        %422 = vmatpush1.msra.mxu0 0.0
        %423 = vmatprep.subr.mxu0 0.0
        %424 = vmatpush1.msra.mxu0 0.0
        %425 = vmatprep.subr.mxu0 0.0
        %426 = vmatpush1.msra.mxu0 0.0
        %427 = vmatprep.subr.mxu0 0.0
        %428 = vmatpush1.msra.mxu0 0.0
        %429 = vmatprep.subr.mxu0 0.0
        %430 = vmatpush1.msra.mxu0 0.0
        %431 = vmatprep.subr.mxu0 0.0
        %432 = vmatpush1.msra.mxu0 0.0
        %433 = vmatprep.subr.mxu0 0.0
        %434 = vmatpush1.msra.mxu0 0.0
        %435 = vmatprep.subr.mxu0 0.0
        %436 = vmatpush1.msra.mxu0 %v274
        %437 = vmatprep.subr.mxu0 0.0
        %438 = vmatpush1.msra.mxu0 %v273
        %439 = vmatprep.subr.mxu0 0.0
        %440 = vmatpush2.msra.mxu0 0.0
        %441 = vmatprep.subr.mxu0 0.0
        %442 = vmatpush2.msra.mxu0 0.0
        %443 = vmatprep.subr.mxu0 0.0
        %444 = vmatpush2.msra.mxu0 0.0
        %445 = vmatprep.subr.mxu0 0.0
        %446 = vmatpush2.msra.mxu0 0.0
        %447 = vmatprep.subr.mxu0 0.0
        %448 = vmatpush2.msra.mxu0 0.0
        %449 = vmatprep.subr.mxu0 0.0
        %450 = vmatpush2.msra.mxu0 0.0
        %451 = vmatprep.subr.mxu0 0.0
        %452 = vmatpush2.msra.mxu0 0.0
        %453 = vmatprep.subr.mxu0 0.0
        %454 = vmatpush2.msra.mxu0 0.0
        %455 = vmatprep.subr.mxu0 0.0
        %456 = vmatpush2.msra.mxu0 0.0
        %457 = vmatprep.subr.mxu0 0.0
        %458 = vmatpush2.msra.mxu0 0.0
        %459 = vmatprep.subr.mxu0 0.0
        %460 = vmatpush2.msra.mxu0 0.0
        %461 = vmatprep.subr.mxu0 0.0
        %462 = vmatpush2.msra.mxu0 0.0
        %463 = vmatprep.subr.mxu0 0.0
        %464 = vmatpush2.msra.mxu0 0.0
        %465 = vmatprep.subr.mxu0 0.0
        %466 = vmatpush2.msra.mxu0 0.0
        %467 = vmatprep.subr.mxu0 0.0
        %468 = vmatpush2.msra.mxu0 0.0
        %469 = vmatprep.subr.mxu0 0.0
        %470 = vmatpush2.msra.mxu0 0.0
        %471 = vmatprep.mubr.f32.mxu0 0.0
        %472 = vmatmul.mubr.f32.gmra.mxu0 %v402
        %v473 = vpop.f32.mrf.mxu0
        %v474 = vadd.f32 0.0, %v473
        %v475 = vpop.f32.mrf.mxu0
        %476 = vmatprep.mubr.f32.mxu0 0.0
        %477 = vmatmul.mubr.f32.gmra.mxu0 %v405
        %v478 = vpop.f32.mrf.mxu0
        %v479 = vadd.f32 0.0, %v478
        %v480 = vpop.f32.mrf.mxu0
        %481 = vdwg.mxu0
        %s482 = scalar_lea.vmem %s2, 8
        %v483 = vld [vmem:[%s482] sm:$0x7f]
        %s484 = scalar_lea.vmem %s3, 1
        %v485 = vld [vmem:[%s484] sm:$0x1]
        %v487 = vlaneseq
        %v488 = vshrl.u32 %v487, 7
        %v489 = vsub.s32 0, %v488
        %v490 = vrot.slane %v485, %v489
        %v493 = vsel %vm283, %v474, 0
        %v496 = vsel %vm283, %v479, 0
        %v499 = vsel %vm290, %v483, 0
        %501 = vmatprep.subr.mxu0 0.0
        %502 = vmatpush1.msra.mxu0 0.0
        %503 = vmatprep.subr.mxu0 0.0
        %504 = vmatpush1.msra.mxu0 0.0
        %505 = vmatprep.subr.mxu0 0.0
        %506 = vmatpush1.msra.mxu0 0.0
        %507 = vmatprep.subr.mxu0 0.0
        %508 = vmatpush1.msra.mxu0 0.0
        %509 = vmatprep.subr.mxu0 0.0
        %510 = vmatpush1.msra.mxu0 0.0
        %511 = vmatprep.subr.mxu0 0.0
        %512 = vmatpush1.msra.mxu0 0.0
        %513 = vmatprep.subr.mxu0 0.0
        %514 = vmatpush1.msra.mxu0 0.0
        %515 = vmatprep.subr.mxu0 0.0
        %516 = vmatpush1.msra.mxu0 0.0
        %517 = vmatprep.subr.mxu0 0.0
        %518 = vmatpush1.msra.mxu0 0.0
        %519 = vmatprep.subr.mxu0 0.0
        %520 = vmatpush1.msra.mxu0 0.0
        %521 = vmatprep.subr.mxu0 0.0
        %522 = vmatpush1.msra.mxu0 0.0
        %523 = vmatprep.subr.mxu0 0.0
        %524 = vmatpush1.msra.mxu0 0.0
        %525 = vmatprep.subr.mxu0 0.0
        %526 = vmatpush1.msra.mxu0 0.0
        %527 = vmatprep.subr.mxu0 0.0
        %528 = vmatpush1.msra.mxu0 0.0
        %529 = vmatprep.subr.mxu0 0.0
        %530 = vmatpush1.msra.mxu0 0.0
        %531 = vmatprep.subr.mxu0 0.0
        %532 = vmatpush1.msra.mxu0 %v499
        %533 = vmatprep.subr.mxu0 0.0
        %534 = vmatpush2.msra.mxu0 0.0
        %535 = vmatprep.subr.mxu0 0.0
        %536 = vmatpush2.msra.mxu0 0.0
        %537 = vmatprep.subr.mxu0 0.0
        %538 = vmatpush2.msra.mxu0 0.0
        %539 = vmatprep.subr.mxu0 0.0
        %540 = vmatpush2.msra.mxu0 0.0
        %541 = vmatprep.subr.mxu0 0.0
        %542 = vmatpush2.msra.mxu0 0.0
        %543 = vmatprep.subr.mxu0 0.0
        %544 = vmatpush2.msra.mxu0 0.0
        %545 = vmatprep.subr.mxu0 0.0
        %546 = vmatpush2.msra.mxu0 0.0
        %547 = vmatprep.subr.mxu0 0.0
        %548 = vmatpush2.msra.mxu0 0.0
        %549 = vmatprep.subr.mxu0 0.0
        %550 = vmatpush2.msra.mxu0 0.0
        %551 = vmatprep.subr.mxu0 0.0
        %552 = vmatpush2.msra.mxu0 0.0
        %553 = vmatprep.subr.mxu0 0.0
        %554 = vmatpush2.msra.mxu0 0.0
        %555 = vmatprep.subr.mxu0 0.0
        %556 = vmatpush2.msra.mxu0 0.0
        %557 = vmatprep.subr.mxu0 0.0
        %558 = vmatpush2.msra.mxu0 0.0
        %559 = vmatprep.subr.mxu0 0.0
        %560 = vmatpush2.msra.mxu0 0.0
        %561 = vmatprep.subr.mxu0 0.0
        %562 = vmatpush2.msra.mxu0 0.0
        %563 = vmatprep.subr.mxu0 0.0
        %564 = vmatpush2.msra.mxu0 0.0
        %565 = vmatprep.mubr.f32.mxu0 0.0
        %566 = vmatmul.mubr.f32.gmra.mxu0 %v493
        %v567 = vpop.f32.mrf.mxu0
        %v568 = vadd.f32 %v490, %v567
        %v569 = vpop.f32.mrf.mxu0
        %570 = vmatprep.mubr.f32.mxu0 0.0
        %571 = vmatmul.mubr.f32.gmra.mxu0 %v496
        %v572 = vpop.f32.mrf.mxu0
        %v573 = vadd.f32 %v490, %v572
        %v574 = vpop.f32.mrf.mxu0
        %575 = vdwg.mxu0
        %v576 = vtanh.pop %v568
        %v577 = vtanh.pop %v573
        %v578 = vmul.f32 %v576, %v577
        %v580 = vrot.slane %v578, 4
        %v582 = vmul.f32 %v578, %v580
        %v584 = vrot.slane %v582, 2
        %v586 = vmul.f32 %v582, %v584
        %v588 = vrot.slane %v586, 1
        %v590 = vmul.f32 %v586, %v588
        %s591 = scalar_lea.vmem %s4, 128
        %v592 = vld [vmem:[%s591] sm:$0xff]
        %v593 = vld [vmem:[%s591 + $0x8] sm:$0xff]
        %v594 = vld [vmem:[%s591 + $0x10] sm:$0xff]
        %v595 = vld [vmem:[%s591 + $0x18] sm:$0xff]
        %v596 = vld [vmem:[%s591 + $0x20] sm:$0xff]
        %v597 = vld [vmem:[%s591 + $0x28] sm:$0xff]
        %v598 = vld [vmem:[%s591 + $0x30] sm:$0xff]
        %v599 = vld [vmem:[%s591 + $0x38] sm:$0xff]
        %v600 = vld [vmem:[%s591 + $0x40] sm:$0xff]
        %v601 = vld [vmem:[%s591 + $0x48] sm:$0xff]
        %v602 = vld [vmem:[%s591 + $0x50] sm:$0xff]
        %v603 = vld [vmem:[%s591 + $0x58] sm:$0xff]
        %v604 = vld [vmem:[%s591 + $0x60] sm:$0xff]
        %v605 = vld [vmem:[%s591 + $0x68] sm:$0xff]
        %v606 = vld [vmem:[%s591 + $0x70] sm:$0xff]
        %v607 = vld [vmem:[%s591 + $0x78] sm:$0xff]
        %608 = vmatprep.subr.mxu0 0.0
        %609 = vmatpush1.msra.mxu0 %v607
        %610 = vmatprep.subr.mxu0 0.0
        %611 = vmatpush1.msra.mxu0 %v606
        %612 = vmatprep.subr.mxu0 0.0
        %613 = vmatpush1.msra.mxu0 %v605
        %614 = vmatprep.subr.mxu0 0.0
        %615 = vmatpush1.msra.mxu0 %v604
        %616 = vmatprep.subr.mxu0 0.0
        %617 = vmatpush1.msra.mxu0 %v603
        %618 = vmatprep.subr.mxu0 0.0
        %619 = vmatpush1.msra.mxu0 %v602
        %620 = vmatprep.subr.mxu0 0.0
        %621 = vmatpush1.msra.mxu0 %v601
        %622 = vmatprep.subr.mxu0 0.0
        %623 = vmatpush1.msra.mxu0 %v600
        %624 = vmatprep.subr.mxu0 0.0
        %625 = vmatpush1.msra.mxu0 %v599
        %626 = vmatprep.subr.mxu0 0.0
        %627 = vmatpush1.msra.mxu0 %v598
        %628 = vmatprep.subr.mxu0 0.0
        %629 = vmatpush1.msra.mxu0 %v597
        %630 = vmatprep.subr.mxu0 0.0
        %631 = vmatpush1.msra.mxu0 %v596
        %632 = vmatprep.subr.mxu0 0.0
        %633 = vmatpush1.msra.mxu0 %v595
        %634 = vmatprep.subr.mxu0 0.0
        %635 = vmatpush1.msra.mxu0 %v594
        %636 = vmatprep.subr.mxu0 0.0
        %637 = vmatpush1.msra.mxu0 %v593
        %638 = vmatprep.subr.mxu0 0.0
        %639 = vmatpush1.msra.mxu0 %v592
        %640 = vmatprep.subr.mxu0 0.0
        %641 = vmatpush2.msra.mxu0 0.0
        %642 = vmatprep.subr.mxu0 0.0
        %643 = vmatpush2.msra.mxu0 0.0
        %644 = vmatprep.subr.mxu0 0.0
        %645 = vmatpush2.msra.mxu0 0.0
        %646 = vmatprep.subr.mxu0 0.0
        %647 = vmatpush2.msra.mxu0 0.0
        %648 = vmatprep.subr.mxu0 0.0
        %649 = vmatpush2.msra.mxu0 0.0
        %650 = vmatprep.subr.mxu0 0.0
        %651 = vmatpush2.msra.mxu0 0.0
        %652 = vmatprep.subr.mxu0 0.0
        %653 = vmatpush2.msra.mxu0 0.0
        %654 = vmatprep.subr.mxu0 0.0
        %655 = vmatpush2.msra.mxu0 0.0
        %656 = vmatprep.subr.mxu0 0.0
        %657 = vmatpush2.msra.mxu0 0.0
        %658 = vmatprep.subr.mxu0 0.0
        %659 = vmatpush2.msra.mxu0 0.0
        %660 = vmatprep.subr.mxu0 0.0
        %661 = vmatpush2.msra.mxu0 0.0
        %662 = vmatprep.subr.mxu0 0.0
        %663 = vmatpush2.msra.mxu0 0.0
        %664 = vmatprep.subr.mxu0 0.0
        %665 = vmatpush2.msra.mxu0 0.0
        %666 = vmatprep.subr.mxu0 0.0
        %667 = vmatpush2.msra.mxu0 0.0
        %668 = vmatprep.subr.mxu0 0.0
        %669 = vmatpush2.msra.mxu0 0.0
        %670 = vmatprep.subr.mxu0 0.0
        %671 = vmatpush2.msra.mxu0 0.0
        %672 = vmatprep.mubr.f32.mxu0 0.0
        %673 = vmatmul.mubr.f32.gmra.mxu0 %v590
        %v674 = vpop.f32.mrf.mxu0
        %v675 = vadd.f32 0.0, %v674
        %v676 = vpop.f32.mrf.mxu0
        %677 = vdwg.mxu0
        %678 = vmatprep.subr.mxu0 0.0
        %679 = vmatpush1.msra.mxu0 %v399
        %680 = vmatprep.subr.mxu0 0.0
        %681 = vmatpush1.msra.mxu0 %v398
        %682 = vmatprep.subr.mxu0 0.0
        %683 = vmatpush1.msra.mxu0 %v397
        %684 = vmatprep.subr.mxu0 0.0
        %685 = vmatpush1.msra.mxu0 %v396
        %686 = vmatprep.subr.mxu0 0.0
        %687 = vmatpush1.msra.mxu0 %v395
        %688 = vmatprep.subr.mxu0 0.0
        %689 = vmatpush1.msra.mxu0 %v394
        %690 = vmatprep.subr.mxu0 0.0
        %691 = vmatpush1.msra.mxu0 %v393
        %692 = vmatprep.subr.mxu0 0.0
        %693 = vmatpush1.msra.mxu0 %v392
        %694 = vmatprep.subr.mxu0 0.0
        %695 = vmatpush1.msra.mxu0 %v391
        %696 = vmatprep.subr.mxu0 0.0
        %697 = vmatpush1.msra.mxu0 %v390
        %698 = vmatprep.subr.mxu0 0.0
        %699 = vmatpush1.msra.mxu0 %v389
        %700 = vmatprep.subr.mxu0 0.0
        %701 = vmatpush1.msra.mxu0 %v388
        %702 = vmatprep.subr.mxu0 0.0
        %703 = vmatpush1.msra.mxu0 %v387
        %704 = vmatprep.subr.mxu0 0.0
        %705 = vmatpush1.msra.mxu0 %v386
        %706 = vmatprep.subr.mxu0 0.0
        %707 = vmatpush1.msra.mxu0 %v385
        %708 = vmatprep.subr.mxu0 0.0
        %709 = vmatpush1.msra.mxu0 %v384
        %710 = vmatprep.subr.mxu0 0.0
        %711 = vmatpush2.msra.mxu0 0.0
        %712 = vmatprep.subr.mxu0 0.0
        %713 = vmatpush2.msra.mxu0 0.0
        %714 = vmatprep.subr.mxu0 0.0
        %715 = vmatpush2.msra.mxu0 0.0
        %716 = vmatprep.subr.mxu0 0.0
        %717 = vmatpush2.msra.mxu0 0.0
        %718 = vmatprep.subr.mxu0 0.0
        %719 = vmatpush2.msra.mxu0 0.0
        %720 = vmatprep.subr.mxu0 0.0
        %721 = vmatpush2.msra.mxu0 0.0
        %722 = vmatprep.subr.mxu0 0.0
        %723 = vmatpush2.msra.mxu0 0.0
        %724 = vmatprep.subr.mxu0 0.0
        %725 = vmatpush2.msra.mxu0 0.0
        %726 = vmatprep.subr.mxu0 0.0
        %727 = vmatpush2.msra.mxu0 0.0
        %728 = vmatprep.subr.mxu0 0.0
        %729 = vmatpush2.msra.mxu0 0.0
        %730 = vmatprep.subr.mxu0 0.0
        %731 = vmatpush2.msra.mxu0 0.0
        %732 = vmatprep.subr.mxu0 0.0
        %733 = vmatpush2.msra.mxu0 0.0
        %734 = vmatprep.subr.mxu0 0.0
        %735 = vmatpush2.msra.mxu0 0.0
        %736 = vmatprep.subr.mxu0 0.0
        %737 = vmatpush2.msra.mxu0 0.0
        %738 = vmatprep.subr.mxu0 0.0
        %739 = vmatpush2.msra.mxu0 0.0
        %740 = vmatprep.subr.mxu0 0.0
        %741 = vmatpush2.msra.mxu0 0.0
        %742 = vmatprep.mubr.f32.mxu0 0.0
        %743 = vmatmul.mubr.f32.gmra.mxu0 %v383
        %v744 = vpop.f32.mrf.mxu0
        %v745 = vadd.f32 %v675, %v744
        %v746 = vpop.f32.mrf.mxu0
        %747 = vdwg.mxu0
        %748 = vmatprep.subr.mxu0 0.0
        %749 = vmatpush1.msra.mxu0 0.0
        %750 = vmatprep.subr.mxu0 0.0
        %751 = vmatpush1.msra.mxu0 0.0
        %752 = vmatprep.subr.mxu0 0.0
        %753 = vmatpush1.msra.mxu0 0.0
        %754 = vmatprep.subr.mxu0 0.0
        %755 = vmatpush1.msra.mxu0 0.0
        %756 = vmatprep.subr.mxu0 0.0
        %757 = vmatpush1.msra.mxu0 0.0
        %758 = vmatprep.subr.mxu0 0.0
        %759 = vmatpush1.msra.mxu0 0.0
        %760 = vmatprep.subr.mxu0 0.0
        %761 = vmatpush1.msra.mxu0 0.0
        %762 = vmatprep.subr.mxu0 0.0
        %763 = vmatpush1.msra.mxu0 0.0
        %764 = vmatprep.subr.mxu0 0.0
        %765 = vmatpush1.msra.mxu0 0.0
        %766 = vmatprep.subr.mxu0 0.0
        %767 = vmatpush1.msra.mxu0 0.0
        %768 = vmatprep.subr.mxu0 0.0
        %769 = vmatpush1.msra.mxu0 0.0
        %770 = vmatprep.subr.mxu0 0.0
        %771 = vmatpush1.msra.mxu0 0.0
        %772 = vmatprep.subr.mxu0 0.0
        %773 = vmatpush1.msra.mxu0 0.0
        %774 = vmatprep.subr.mxu0 0.0
        %775 = vmatpush1.msra.mxu0 0.0
        %776 = vmatprep.subr.mxu0 0.0
        %777 = vmatpush1.msra.mxu0 %v479
        %778 = vmatprep.subr.mxu0 0.0
        %779 = vmatpush1.msra.mxu0 %v474
        %780 = vmatprep.subr.mxu0 0.0
        %781 = vmatpush2.msra.mxu0 0.0
        %782 = vmatprep.subr.mxu0 0.0
        %783 = vmatpush2.msra.mxu0 0.0
        %784 = vmatprep.subr.mxu0 0.0
        %785 = vmatpush2.msra.mxu0 0.0
        %786 = vmatprep.subr.mxu0 0.0
        %787 = vmatpush2.msra.mxu0 0.0
        %788 = vmatprep.subr.mxu0 0.0
        %789 = vmatpush2.msra.mxu0 0.0
        %790 = vmatprep.subr.mxu0 0.0
        %791 = vmatpush2.msra.mxu0 0.0
        %792 = vmatprep.subr.mxu0 0.0
        %793 = vmatpush2.msra.mxu0 0.0
        %794 = vmatprep.subr.mxu0 0.0
        %795 = vmatpush2.msra.mxu0 0.0
        %796 = vmatprep.subr.mxu0 0.0
        %797 = vmatpush2.msra.mxu0 0.0
        %798 = vmatprep.subr.mxu0 0.0
        %799 = vmatpush2.msra.mxu0 0.0
        %800 = vmatprep.subr.mxu0 0.0
        %801 = vmatpush2.msra.mxu0 0.0
        %802 = vmatprep.subr.mxu0 0.0
        %803 = vmatpush2.msra.mxu0 0.0
        %804 = vmatprep.subr.mxu0 0.0
        %805 = vmatpush2.msra.mxu0 0.0
        %806 = vmatprep.subr.mxu0 0.0
        %807 = vmatpush2.msra.mxu0 0.0
        %808 = vmatprep.subr.mxu0 0.0
        %809 = vmatpush2.msra.mxu0 0.0
        %810 = vmatprep.subr.mxu0 0.0
        %811 = vmatpush2.msra.mxu0 0.0
        %812 = vmatprep.mubr.f32.mxu0 0.0
        %813 = vmatmul.mubr.f32.gmra.mxu0 %v402
        %v814 = vpop.f32.mrf.mxu0
        %v815 = vadd.f32 0.0, %v814
        %v816 = vpop.f32.mrf.mxu0
        %817 = vmatprep.mubr.f32.mxu0 0.0
        %818 = vmatmul.mubr.f32.gmra.mxu0 %v405
        %v819 = vpop.f32.mrf.mxu0
        %v820 = vadd.f32 0.0, %v819
        %v821 = vpop.f32.mrf.mxu0
        %822 = vdwg.mxu0
        %s823 = scalar_lea.vmem %s2, 16
        %v824 = vld [vmem:[%s823] sm:$0x7f]
        %s825 = scalar_lea.vmem %s3, 2
        %v826 = vld [vmem:[%s825] sm:$0x1]
        %v828 = vlaneseq
        %v829 = vshrl.u32 %v828, 7
        %v830 = vsub.s32 0, %v829
        %v831 = vrot.slane %v826, %v830
        %v834 = vsel %vm283, %v815, 0
        %v837 = vsel %vm283, %v820, 0
        %v840 = vsel %vm290, %v824, 0
        %842 = vmatprep.subr.mxu0 0.0
        %843 = vmatpush1.msra.mxu0 0.0
        %844 = vmatprep.subr.mxu0 0.0
        %845 = vmatpush1.msra.mxu0 0.0
        %846 = vmatprep.subr.mxu0 0.0
        %847 = vmatpush1.msra.mxu0 0.0
        %848 = vmatprep.subr.mxu0 0.0
        %849 = vmatpush1.msra.mxu0 0.0
        %850 = vmatprep.subr.mxu0 0.0
        %851 = vmatpush1.msra.mxu0 0.0
        %852 = vmatprep.subr.mxu0 0.0
        %853 = vmatpush1.msra.mxu0 0.0
        %854 = vmatprep.subr.mxu0 0.0
        %855 = vmatpush1.msra.mxu0 0.0
        %856 = vmatprep.subr.mxu0 0.0
        %857 = vmatpush1.msra.mxu0 0.0
        %858 = vmatprep.subr.mxu0 0.0
        %859 = vmatpush1.msra.mxu0 0.0
        %860 = vmatprep.subr.mxu0 0.0
        %861 = vmatpush1.msra.mxu0 0.0
        %862 = vmatprep.subr.mxu0 0.0
        %863 = vmatpush1.msra.mxu0 0.0
        %864 = vmatprep.subr.mxu0 0.0
        %865 = vmatpush1.msra.mxu0 0.0
        %866 = vmatprep.subr.mxu0 0.0
        %867 = vmatpush1.msra.mxu0 0.0
        %868 = vmatprep.subr.mxu0 0.0
        %869 = vmatpush1.msra.mxu0 0.0
        %870 = vmatprep.subr.mxu0 0.0
        %871 = vmatpush1.msra.mxu0 0.0
        %872 = vmatprep.subr.mxu0 0.0
        %873 = vmatpush1.msra.mxu0 %v840
        %874 = vmatprep.subr.mxu0 0.0
        %875 = vmatpush2.msra.mxu0 0.0
        %876 = vmatprep.subr.mxu0 0.0
        %877 = vmatpush2.msra.mxu0 0.0
        %878 = vmatprep.subr.mxu0 0.0
        %879 = vmatpush2.msra.mxu0 0.0
        %880 = vmatprep.subr.mxu0 0.0
        %881 = vmatpush2.msra.mxu0 0.0
        %882 = vmatprep.subr.mxu0 0.0
        %883 = vmatpush2.msra.mxu0 0.0
        %884 = vmatprep.subr.mxu0 0.0
        %885 = vmatpush2.msra.mxu0 0.0
        %886 = vmatprep.subr.mxu0 0.0
        %887 = vmatpush2.msra.mxu0 0.0
        %888 = vmatprep.subr.mxu0 0.0
        %889 = vmatpush2.msra.mxu0 0.0
        %890 = vmatprep.subr.mxu0 0.0
        %891 = vmatpush2.msra.mxu0 0.0
        %892 = vmatprep.subr.mxu0 0.0
        %893 = vmatpush2.msra.mxu0 0.0
        %894 = vmatprep.subr.mxu0 0.0
        %895 = vmatpush2.msra.mxu0 0.0
        %896 = vmatprep.subr.mxu0 0.0
        %897 = vmatpush2.msra.mxu0 0.0
        %898 = vmatprep.subr.mxu0 0.0
        %899 = vmatpush2.msra.mxu0 0.0
        %900 = vmatprep.subr.mxu0 0.0
        %901 = vmatpush2.msra.mxu0 0.0
        %902 = vmatprep.subr.mxu0 0.0
        %903 = vmatpush2.msra.mxu0 0.0
        %904 = vmatprep.subr.mxu0 0.0
        %905 = vmatpush2.msra.mxu0 0.0
        %906 = vmatprep.mubr.f32.mxu0 0.0
        %907 = vmatmul.mubr.f32.gmra.mxu0 %v834
        %v908 = vpop.f32.mrf.mxu0
        %v909 = vadd.f32 %v831, %v908
        %v910 = vpop.f32.mrf.mxu0
        %911 = vmatprep.mubr.f32.mxu0 0.0
        %912 = vmatmul.mubr.f32.gmra.mxu0 %v837
        %v913 = vpop.f32.mrf.mxu0
        %v914 = vadd.f32 %v831, %v913
        %v915 = vpop.f32.mrf.mxu0
        %916 = vdwg.mxu0
        %v917 = vtanh.pop %v909
        %v918 = vtanh.pop %v914
        %v919 = vmul.f32 %v917, %v918
        %v921 = vrot.slane %v919, 4
        %v923 = vmul.f32 %v919, %v921
        %v925 = vrot.slane %v923, 2
        %v927 = vmul.f32 %v923, %v925
        %v929 = vrot.slane %v927, 1
        %v931 = vmul.f32 %v927, %v929
        %s932 = scalar_lea.vmem %s4, 256
        %v933 = vld [vmem:[%s932] sm:$0xff]
        %v934 = vld [vmem:[%s932 + $0x8] sm:$0xff]
        %v935 = vld [vmem:[%s932 + $0x10] sm:$0xff]
        %v936 = vld [vmem:[%s932 + $0x18] sm:$0xff]
        %v937 = vld [vmem:[%s932 + $0x20] sm:$0xff]
        %v938 = vld [vmem:[%s932 + $0x28] sm:$0xff]
        %v939 = vld [vmem:[%s932 + $0x30] sm:$0xff]
        %v940 = vld [vmem:[%s932 + $0x38] sm:$0xff]
        %v941 = vld [vmem:[%s932 + $0x40] sm:$0xff]
        %v942 = vld [vmem:[%s932 + $0x48] sm:$0xff]
        %v943 = vld [vmem:[%s932 + $0x50] sm:$0xff]
        %v944 = vld [vmem:[%s932 + $0x58] sm:$0xff]
        %v945 = vld [vmem:[%s932 + $0x60] sm:$0xff]
        %v946 = vld [vmem:[%s932 + $0x68] sm:$0xff]
        %v947 = vld [vmem:[%s932 + $0x70] sm:$0xff]
        %v948 = vld [vmem:[%s932 + $0x78] sm:$0xff]
        %949 = vmatprep.subr.mxu0 0.0
        %950 = vmatpush1.msra.mxu0 %v948
        %951 = vmatprep.subr.mxu0 0.0
        %952 = vmatpush1.msra.mxu0 %v947
        %953 = vmatprep.subr.mxu0 0.0
        %954 = vmatpush1.msra.mxu0 %v946
        %955 = vmatprep.subr.mxu0 0.0
        %956 = vmatpush1.msra.mxu0 %v945
        %957 = vmatprep.subr.mxu0 0.0
        %958 = vmatpush1.msra.mxu0 %v944
        %959 = vmatprep.subr.mxu0 0.0
        %960 = vmatpush1.msra.mxu0 %v943
        %961 = vmatprep.subr.mxu0 0.0
        %962 = vmatpush1.msra.mxu0 %v942
        %963 = vmatprep.subr.mxu0 0.0
        %964 = vmatpush1.msra.mxu0 %v941
        %965 = vmatprep.subr.mxu0 0.0
        %966 = vmatpush1.msra.mxu0 %v940
        %967 = vmatprep.subr.mxu0 0.0
        %968 = vmatpush1.msra.mxu0 %v939
        %969 = vmatprep.subr.mxu0 0.0
        %970 = vmatpush1.msra.mxu0 %v938
        %971 = vmatprep.subr.mxu0 0.0
        %972 = vmatpush1.msra.mxu0 %v937
        %973 = vmatprep.subr.mxu0 0.0
        %974 = vmatpush1.msra.mxu0 %v936
        %975 = vmatprep.subr.mxu0 0.0
        %976 = vmatpush1.msra.mxu0 %v935
        %977 = vmatprep.subr.mxu0 0.0
        %978 = vmatpush1.msra.mxu0 %v934
        %979 = vmatprep.subr.mxu0 0.0
        %980 = vmatpush1.msra.mxu0 %v933
        %981 = vmatprep.subr.mxu0 0.0
        %982 = vmatpush2.msra.mxu0 0.0
        %983 = vmatprep.subr.mxu0 0.0
        %984 = vmatpush2.msra.mxu0 0.0
        %985 = vmatprep.subr.mxu0 0.0
        %986 = vmatpush2.msra.mxu0 0.0
        %987 = vmatprep.subr.mxu0 0.0
        %988 = vmatpush2.msra.mxu0 0.0
        %989 = vmatprep.subr.mxu0 0.0
        %990 = vmatpush2.msra.mxu0 0.0
        %991 = vmatprep.subr.mxu0 0.0
        %992 = vmatpush2.msra.mxu0 0.0
        %993 = vmatprep.subr.mxu0 0.0
        %994 = vmatpush2.msra.mxu0 0.0
        %995 = vmatprep.subr.mxu0 0.0
        %996 = vmatpush2.msra.mxu0 0.0
        %997 = vmatprep.subr.mxu0 0.0
        %998 = vmatpush2.msra.mxu0 0.0
        %999 = vmatprep.subr.mxu0 0.0
        %1000 = vmatpush2.msra.mxu0 0.0
        %1001 = vmatprep.subr.mxu0 0.0
        %1002 = vmatpush2.msra.mxu0 0.0
        %1003 = vmatprep.subr.mxu0 0.0
        %1004 = vmatpush2.msra.mxu0 0.0
        %1005 = vmatprep.subr.mxu0 0.0
        %1006 = vmatpush2.msra.mxu0 0.0
        %1007 = vmatprep.subr.mxu0 0.0
        %1008 = vmatpush2.msra.mxu0 0.0
        %1009 = vmatprep.subr.mxu0 0.0
        %1010 = vmatpush2.msra.mxu0 0.0
        %1011 = vmatprep.subr.mxu0 0.0
        %1012 = vmatpush2.msra.mxu0 0.0
        %1013 = vmatprep.mubr.f32.mxu0 0.0
        %1014 = vmatmul.mubr.f32.gmra.mxu0 %v931
        %v1015 = vpop.f32.mrf.mxu0
        %v1016 = vadd.f32 0.0, %v1015
        %v1017 = vpop.f32.mrf.mxu0
        %1018 = vdwg.mxu0
        %v1019 = vadd.f32 %v745, %v1016
        %v1020 = vld [vmem:[%s5] sm:$0x1]
        %v1021 = vadd.f32 %v1019, %v1020
        %vm1022 = vcmask 57344
        %1023 = vst.msk [vmem:[%s258] sm:$0x1] %vm1022, %v1021
        %s1024 = sand.u32 %s164, 1
        %s1025 = scalar_lea.sflag [#allocation3], %s1024
        %s1026 = sand.u32 %s164, 1
        %s1027 = scalar_lea.vmem [#allocation2], %s1026
        // Predicated region
        $region45: #{tpu_custom_call.1} parent=43 // pred_check
          %p1028 = pneg %p174
        $region46: #{tpu_custom_call.1} parent=43 // pred_check_branch
          %1030 = sbr.rel (%p1028) target = $region48
        $region47: #{tpu_custom_call.1} parent=43 // pred_region
          %s1032 = ssub.s32 16, 16
          %1033 = vsyncadd %s1025, %s1032
          %s1034 = smul.addr %s20, 16
          %s1035 = scalar_lea.hbm %s6, %s1034
          %s1037 = sshll.u32 %s1027, 4
          %s1038 = int_to_ptr.vmem [resolvable:$true] %s1037
          %1040 = dma.vmem_to_hbm [thread:$0]  %s1038, 16, %s1035, %s1025
        $region48: #{tpu_custom_call.1} parent=43 // pred_fallthru
          _
      $region44: #{tpu_custom_call.1} parent=5 // pred_fallthru
        _
      %p1041 = scmp.le.s32.totalorder 2, %s15
      // Predicated region
      $region49: #{tpu_custom_call.1} parent=5 // pred_check
        %p1042 = pneg %p1041
      $region50: #{tpu_custom_call.1} parent=5 // pred_check_branch
        %1044 = sbr.rel (%p1042) target = $region52
      $region51: #{tpu_custom_call.1} parent=5 // pred_region
        %s1045 = ssub.s32 %s15, 2
        // Predicated region
        $region53: #{tpu_custom_call.1} parent=51 // pred_check
          %p1046 = pneg %p180
        $region54: #{tpu_custom_call.1} parent=51 // pred_check_branch
          %1048 = sbr.rel (%p1046) target = $region56
        $region55: #{tpu_custom_call.1} parent=51 // pred_region
          %s1049 = sand.u32 %s165, 1
          %s1050 = scalar_lea.sflag [#allocation3], %s1049
          %s1051 = sand.u32 %s165, 1
          %s1052 = scalar_lea.vmem [#allocation2], %s1051
          %1053 = dma.done %s1050, 16
        $region56: #{tpu_custom_call.1} parent=51 // pred_fallthru
          _
      $region52: #{tpu_custom_call.1} parent=5 // pred_fallthru
        _
    $region6: #{tpu_custom_call.1} parent=1 // loop_footer
      %s19 = sadd.s32 1, %s15
    $region7: #{tpu_custom_call.1} parent=1 // loop_footer_branch
      %14 = sbr.rel target = $region3
    $region8: #{tpu_custom_call.1} parent=1 // loop_exit
      _
    %1054 = vsyncpa [#allocation3], 1
    %s1055 = scalar_lea.sflag [#allocation3], 1
    %1056 = vsyncpa %s1055, 1

</llo_original>
